<compile_context>
chip_gen: v7x
topology: tpu7x:2x2x1
jax: 0.10.0
libtpu: 0.0.40
codegen_flags: <defaults>
</compile_context>

<pallas_src>
import math

import jax
import jax.numpy as jnp
from jax.experimental import pallas as pl
from jax.experimental.pallas import tpu as pltpu

EPS = 1e-5              # UnitGaussianNormalizer default eps
LANES = 512             # lane-dense last dim (multiple of 128)
MAX_SINGLE_TILE_ROWS = 1024   # <= 2 MiB f32 per tile -> single row tile
ROW_TILE = 512                # ~1 MiB f32 tiles for the streamed path
SMALL_BYTES = 2 * 1024 * 1024  # below this, use the single-step path


def _decode_small_kernel(x_ref, scale_ref, mean_ref, o_ref):
    # x_ref: (B, R, L)   scale_ref/mean_ref: (R, L)  -> broadcast over batch.
    x = x_ref[...].astype(jnp.float32)
    s = scale_ref[...].astype(jnp.float32)
    m = mean_ref[...].astype(jnp.float32)
    o_ref[...] = (x * s + m).astype(o_ref.dtype)


def _decode_tiled_kernel(x_ref, scale_ref, mean_ref, o_ref):
    # x_ref: (1, Rt, L)  scale_ref/mean_ref: (Rt, L)
    x = x_ref[...].astype(jnp.float32)
    s = scale_ref[...].astype(jnp.float32)
    m = mean_ref[...].astype(jnp.float32)
    o_ref[...] = (x * s + m).astype(o_ref.dtype)


def output_denormalize(x, mean, std):
    """y = x * (std + eps) + mean, broadcasting per-location stats over batch."""
    B = x.shape[0]
    sample_shape = x.shape[1:]
    assert mean.shape == sample_shape and std.shape == sample_shape
    N = math.prod(sample_shape)

    # Fold eps into the stats once (tiny op, runs outside the hot kernel).
    scale = (std + EPS).astype(std.dtype)

    # Flatten each sample and lay it out lane-dense: (rows, LANES).
    rows = -(-N // LANES)
    if rows <= MAX_SINGLE_TILE_ROWS:
        row_tile = rows
        rows_final = rows
    else:
        row_tile = ROW_TILE
        rows_final = -(-rows // row_tile) * row_tile
    n_pad = rows_final * LANES

    xf = x.reshape(B, N)
    sf = scale.reshape(N)
    mf = mean.reshape(N)
    if n_pad != N:
        xf = jnp.pad(xf, ((0, 0), (0, n_pad - N)))
        sf = jnp.pad(sf, (0, n_pad - N))
        mf = jnp.pad(mf, (0, n_pad - N))

    x3 = xf.reshape(B, rows_final, LANES)
    s2 = sf.reshape(rows_final, LANES)
    m2 = mf.reshape(rows_final, LANES)

    total_bytes = B * n_pad * x.dtype.itemsize

    if total_bytes <= SMALL_BYTES:
        # Single-step kernel: whole (padded) problem is one block, batch folded in.
        out = pl.pallas_call(
            _decode_small_kernel,
            out_shape=jax.ShapeDtypeStruct((B, rows_final, LANES), x.dtype),
            grid_spec=pltpu.PrefetchScalarGridSpec(
                num_scalar_prefetch=0,
                grid=(1,),
                in_specs=[
                    pl.BlockSpec((B, rows_final, LANES), lambda i: (0, 0, 0)),
                    pl.BlockSpec((rows_final, LANES), lambda i: (0, 0)),
                    pl.BlockSpec((rows_final, LANES), lambda i: (0, 0)),
                ],
                out_specs=pl.BlockSpec((B, rows_final, LANES), lambda i: (0, 0, 0)),
            ),
            compiler_params=pltpu.CompilerParams(
                dimension_semantics=("arbitrary",)
            ),
        )(x3, s2, m2)
    else:
        # Streamed path: ~1 MiB lane-dense tiles, batch innermost so the stats
        # tile (index independent of b) stays resident in VMEM across steps.
        num_row_tiles = rows_final // row_tile
        out = pl.pallas_call(
            _decode_tiled_kernel,
            out_shape=jax.ShapeDtypeStruct((B, rows_final, LANES), x.dtype),
            grid_spec=pltpu.PrefetchScalarGridSpec(
                num_scalar_prefetch=0,
                grid=(num_row_tiles, B),
                in_specs=[
                    pl.BlockSpec((1, row_tile, LANES), lambda r, b: (b, r, 0)),
                    pl.BlockSpec((row_tile, LANES), lambda r, b: (r, 0)),
                    pl.BlockSpec((row_tile, LANES), lambda r, b: (r, 0)),
                ],
                out_specs=pl.BlockSpec((1, row_tile, LANES), lambda r, b: (b, r, 0)),
            ),
            compiler_params=pltpu.CompilerParams(
                dimension_semantics=("parallel", "parallel")
            ),
        )(x3, s2, m2)

    out = out.reshape(B, n_pad)
    if n_pad != N:
        out = out[:, :N]
    return out.reshape(x.shape)


if __name__ == "__main__":
    key = jax.random.PRNGKey(0)
    kx, km, ks = jax.random.split(key, 3)

    B, C, H, W = 2, 4, 16, 16
    x = jax.random.normal(kx, (B, C, H, W), dtype=jnp.float32)
    # Deterministic synthetic normalizer statistics (shapes per UnitGaussianNormalizer).
    mean = jax.random.normal(km, (C, H, W), dtype=jnp.float32)
    std = jnp.abs(jax.random.normal(ks, (C, H, W), dtype=jnp.float32)) + 0.5

    y = output_denormalize(x, mean, std)
    y = jax.block_until_ready(y)

    # Pure-JAX reference of the decode semantics.
    y_ref = x * (std + EPS)[None] + mean[None]
    assert y.shape == (B, C, H, W)
    assert jnp.allclose(y, y_ref, atol=1e-6, rtol=1e-6)

    print("KERNEL_OK")
</pallas_src>

<mosaic_0001>
module attributes {stable_mosaic.version = 11 : i64} {
  func.func @_decode_small_kernel(%arg0: i32, %arg1: memref<2x2x512xf32, #tpu.memory_space<vmem>>, %arg2: memref<2x512xf32, #tpu.memory_space<vmem>>, %arg3: memref<2x512xf32, #tpu.memory_space<vmem>>, %arg4: memref<2x2x512xf32, #tpu.memory_space<vmem>>) attributes {dimension_semantics = [#tpu.dimension_semantics<arbitrary>], iteration_bounds = array<i64: 1>, scalar_prefetch = 0 : i64, scratch_operands = 0 : i64, tpu.core_type = #tpu.core_type<tc>, window_params = [{pipeline_mode = #tpu.pipeline_mode<synchronous>, transform_indices = @transform_0, window_bounds = array<i64: 2, 2, 512>}, {pipeline_mode = #tpu.pipeline_mode<synchronous>, transform_indices = @transform_1, window_bounds = array<i64: 2, 512>}, {pipeline_mode = #tpu.pipeline_mode<synchronous>, transform_indices = @transform_2, window_bounds = array<i64: 2, 512>}, {pipeline_mode = #tpu.pipeline_mode<synchronous>, transform_indices = @transform_3, window_bounds = array<i64: 2, 2, 512>}]} {
    %c0 = arith.constant 0 : index
    %c0_0 = arith.constant 0 : index
    %c0_1 = arith.constant 0 : index
    %0 = vector.load %arg1[%c0, %c0_0, %c0_1] : memref<2x2x512xf32, #tpu.memory_space<vmem>>, vector<2x2x512xf32>
    %c0_2 = arith.constant 0 : index
    %c0_3 = arith.constant 0 : index
    %1 = vector.load %arg2[%c0_2, %c0_3] : memref<2x512xf32, #tpu.memory_space<vmem>>, vector<2x512xf32>
    %c0_4 = arith.constant 0 : index
    %c0_5 = arith.constant 0 : index
    %2 = vector.load %arg3[%c0_4, %c0_5] : memref<2x512xf32, #tpu.memory_space<vmem>>, vector<2x512xf32>
    %3 = vector.shape_cast %1 : vector<2x512xf32> to vector<1x2x512xf32>
    %4 = vector.broadcast %3 : vector<1x2x512xf32> to vector<2x2x512xf32>
    %5 = arith.mulf %0, %4 : vector<2x2x512xf32>
    %6 = vector.shape_cast %2 : vector<2x512xf32> to vector<1x2x512xf32>
    %7 = vector.broadcast %6 : vector<1x2x512xf32> to vector<2x2x512xf32>
    %8 = arith.addf %5, %7 : vector<2x2x512xf32>
    %c0_6 = arith.constant 0 : index
    %c0_7 = arith.constant 0 : index
    %c0_8 = arith.constant 0 : index
    %9 = vector.load %arg4[%c0_6, %c0_7, %c0_8] : memref<2x2x512xf32, #tpu.memory_space<vmem>>, vector<2x2x512xf32>
    tpu.vector_store %arg4[%c0_6, %c0_7, %c0_8], %8 {strides = array<i32>} : memref<2x2x512xf32, #tpu.memory_space<vmem>>, vector<2x2x512xf32>,
    return
  }
  func.func @transform_0(%arg0: i32) -> (i32, i32, i32) {
    %c0_i32 = arith.constant 0 : i32
    %c0_i32_0 = arith.constant 0 : i32
    %c0_i32_1 = arith.constant 0 : i32
    %c0_i32_2 = arith.constant 0 : i32
    return %c0_i32, %c0_i32_0, %c0_i32_1 : i32, i32, i32
  }
  func.func @transform_1(%arg0: i32) -> (i32, i32) {
    %c0_i32 = arith.constant 0 : i32
    %c0_i32_0 = arith.constant 0 : i32
    %c0_i32_1 = arith.constant 0 : i32
    return %c0_i32, %c0_i32_0 : i32, i32
  }
  func.func @transform_2(%arg0: i32) -> (i32, i32) {
    %c0_i32 = arith.constant 0 : i32
    %c0_i32_0 = arith.constant 0 : i32
    %c0_i32_1 = arith.constant 0 : i32
    return %c0_i32, %c0_i32_0 : i32, i32
  }
  func.func @transform_3(%arg0: i32) -> (i32, i32, i32) {
    %c0_i32 = arith.constant 0 : i32
    %c0_i32_0 = arith.constant 0 : i32
    %c0_i32_1 = arith.constant 0 : i32
    %c0_i32_2 = arith.constant 0 : i32
    return %c0_i32, %c0_i32_0, %c0_i32_1 : i32, i32, i32
  }
}

</mosaic_0001>

<llo_original>
// kernel: tpu_custom_call.1
$region0: #{tpu_custom_call.1}
  #allocation0 [shape = 'u32[]', space=smem, size = 0x4, offset = 0x4, fixed_abs, tag = 'smem constant byte address 0x4 - core index']
  #allocation1 [shape = 'u32[144,128]{1,0:T(1,128)}', space=vmem, size = 0x12000, scoped, tag = 'internal scratch']
  %s0 = inlined_call_operand.hbm [shape: f32[2,2,512], index: 0, kind: input, shape index: {}]
  %s1 = inlined_call_operand.hbm [shape: f32[2,512], index: 1, kind: input, shape index: {}]
  %s2 = inlined_call_operand.hbm [shape: f32[2,512], index: 2, kind: input, shape index: {}]
  %s3 = inlined_call_operand.hbm [shape: f32[2,2,512], index: 3, kind: output, shape index: {}]
  %s4 = sld [smem:[#allocation0]]
  $region34: #{tpu_custom_call.1} parent=0
    _
  %s6 = ssub.s32 1, %s4
  %s7 = scalar_select 0, %s6, %s4
  $region1: #{tpu_custom_call.1} parent=0
    #allocation2 [shape = 'u8[8192]{0}', space=vmem, size = 0x2000, scoped, tag = 'input window, operand 0, single buffered']
    #allocation3 [shape = 's32[1]{0}', space=sflag, size = 0x4, scoped, tag = 'scoped memory for tpu_custom_call.1']
    #allocation4 [shape = 's32[1]{0}', space=sflag, size = 0x4, scoped, tag = 'scoped memory for tpu_custom_call.1']
    #allocation5 [shape = 'u8[4096]{0}', space=vmem, size = 0x1000, scoped, tag = 'input window, operand 1, single buffered']
    #allocation6 [shape = 's32[1]{0}', space=sflag, size = 0x4, scoped, tag = 'scoped memory for tpu_custom_call.1']
    #allocation7 [shape = 'u8[4096]{0}', space=vmem, size = 0x1000, scoped, tag = 'input window, operand 2, single buffered']
    #allocation8 [shape = 'u8[8192]{0}', space=vmem, size = 0x2000, scoped, tag = 'output window, operand 0, single buffered']
    %8 = vsyncpa [#allocation3], 0
    %9 = vsyncpa [#allocation6], 0
    %10 = vsyncpa [#allocation4], 0
    // Predicated region
    $region2: #{tpu_custom_call.1} parent=1 // pred_check
      _
    $region3: #{tpu_custom_call.1} parent=1 // pred_check_branch
      %12 = sbr.rel (0) target = $region5
    $region4: #{tpu_custom_call.1} parent=1 // pred_region
      %s14 = ssub.s32 256, 256
      %15 = vsyncadd [#allocation3], %s14
      %s16 = sshll.u32 [#allocation2], 4
      %s17 = int_to_ptr.vmem [resolvable:$true] %s16
      %22 = dma.hbm_to_vmem [thread:$0]  %s0, 256, %s17, [#allocation3], 128, 128, 8
    $region5: #{tpu_custom_call.1} parent=1 // pred_fallthru
      _
    // Predicated region
    $region6: #{tpu_custom_call.1} parent=1 // pred_check
      _
    $region7: #{tpu_custom_call.1} parent=1 // pred_check_branch
      %24 = sbr.rel (0) target = $region9
    $region8: #{tpu_custom_call.1} parent=1 // pred_region
      %s26 = ssub.s32 128, 128
      %27 = vsyncadd [#allocation6], %s26
      %s29 = sshll.u32 [#allocation5], 4
      %s30 = int_to_ptr.vmem [resolvable:$true] %s29
      %32 = dma.hbm_to_vmem [thread:$0]  %s1, 128, %s30, [#allocation6]
    $region9: #{tpu_custom_call.1} parent=1 // pred_fallthru
      _
    // Predicated region
    $region10: #{tpu_custom_call.1} parent=1 // pred_check
      _
    $region11: #{tpu_custom_call.1} parent=1 // pred_check_branch
      %34 = sbr.rel (0) target = $region13
    $region12: #{tpu_custom_call.1} parent=1 // pred_region
      %s36 = ssub.s32 128, 128
      %37 = vsyncadd [#allocation6], %s36
      %s39 = sshll.u32 [#allocation7], 4
      %s40 = int_to_ptr.vmem [resolvable:$true] %s39
      %42 = dma.hbm_to_vmem [thread:$0]  %s2, 128, %s40, [#allocation6]
    $region13: #{tpu_custom_call.1} parent=1 // pred_fallthru
      _
    // Predicated region
    $region14: #{tpu_custom_call.1} parent=1 // pred_check
      _
    $region15: #{tpu_custom_call.1} parent=1 // pred_check_branch
      %44 = sbr.rel (0) target = $region17
    $region16: #{tpu_custom_call.1} parent=1 // pred_region
      %45 = dma.done [#allocation3], 256
    $region17: #{tpu_custom_call.1} parent=1 // pred_fallthru
      _
    // Predicated region
    $region18: #{tpu_custom_call.1} parent=1 // pred_check
      _
    $region19: #{tpu_custom_call.1} parent=1 // pred_check_branch
      %47 = sbr.rel (0) target = $region21
    $region20: #{tpu_custom_call.1} parent=1 // pred_region
      %48 = dma.done [#allocation6], 128
    $region21: #{tpu_custom_call.1} parent=1 // pred_fallthru
      _
    // Predicated region
    $region22: #{tpu_custom_call.1} parent=1 // pred_check
      _
    $region23: #{tpu_custom_call.1} parent=1 // pred_check_branch
      %50 = sbr.rel (0) target = $region25
    $region24: #{tpu_custom_call.1} parent=1 // pred_region
      %51 = dma.done [#allocation6], 128
    $region25: #{tpu_custom_call.1} parent=1 // pred_fallthru
      _
    %v52 = vld [vmem:[#allocation2] sm:$0xff]
    %v53 = vld [vmem:[#allocation2 + $0x8] sm:$0xff]
    %v54 = vld [vmem:[#allocation5] sm:$0xff]
    %v55 = vld [vmem:[#allocation7] sm:$0xff]
    %v56 = vmul.f32 %v52, %v54
    %v57 = vmul.f32 %v53, %v54
    %v58 = vadd.f32 %v56, %v55
    %v59 = vadd.f32 %v57, %v55
    %60 = vst [vmem:[#allocation8] sm:$0xff] %v58
    %61 = vst [vmem:[#allocation8 + $0x8] sm:$0xff] %v59
    // Predicated region
    $region26: #{tpu_custom_call.1} parent=1 // pred_check
      _
    $region27: #{tpu_custom_call.1} parent=1 // pred_check_branch
      %63 = sbr.rel (0) target = $region29
    $region28: #{tpu_custom_call.1} parent=1 // pred_region
      %s65 = ssub.s32 256, 256
      %66 = vsyncadd [#allocation4], %s65
      %s67 = sshll.u32 [#allocation8], 4
      %s68 = int_to_ptr.vmem [resolvable:$true] %s67
      %73 = dma.vmem_to_hbm [thread:$0]  %s68, 256, %s3, [#allocation4], 128, 128, 8
    $region29: #{tpu_custom_call.1} parent=1 // pred_fallthru
      _
    // Predicated region
    $region30: #{tpu_custom_call.1} parent=1 // pred_check
      _
    $region31: #{tpu_custom_call.1} parent=1 // pred_check_branch
      %75 = sbr.rel (0) target = $region33
    $region32: #{tpu_custom_call.1} parent=1 // pred_region
      %76 = dma.done [#allocation4], 256
    $region33: #{tpu_custom_call.1} parent=1 // pred_fallthru
      _
    %77 = vsyncpa [#allocation3], 1
    %78 = vsyncpa [#allocation6], 1
    %79 = vsyncpa [#allocation4], 1

</llo_original>
